<compile_context>
chip_gen: v5e
topology: v5e:2x2
jax: 0.10.0
libtpu: 0.0.40
codegen_flags: <defaults>
</compile_context>

<pallas_src>
import functools

import jax
import jax.numpy as jnp
from jax.experimental import pallas as pl
from jax.experimental.pallas import tpu as pltpu


def _round_up(n, m):
    return ((n + m - 1) // m) * m


def encoder_kernel(x_ref, w1_ref, b1_ref, wmv_ref, bmv_ref, eps_ref,
                   z_ref, mv_ref, *, lp):
    # FC_input + ReLU: bf16 operands on the MXU (x cast in-kernel), f32 accum.
    x = x_ref[...].astype(jnp.bfloat16)
    h = jnp.dot(x, w1_ref[...], preferred_element_type=jnp.float32)
    h = jnp.maximum(h + b1_ref[...], 0.0)

    # FC_mean and FC_var fused into one lane-dense matmul: wmv = [W_mean | W_var].
    mv = jnp.dot(h.astype(jnp.bfloat16), wmv_ref[...],
                 preferred_element_type=jnp.float32) + bmv_ref[...]
    mv_ref[...] = mv                       # packed [mean | log_var] output

    # Reparameterization: z = mean + exp(0.5 * log_var) * eps  (eps ~ U[0,1)).
    mean = mv[:, :lp]
    log_var = mv[:, lp:]
    z_ref[...] = mean + jnp.exp(0.5 * log_var) * eps_ref[...]


def pack_params(params):
    """One-time weight packing for the kernel (call once at init).

    Lane dims (hidden, latent) are zero-padded to multiples of 128, the
    mean/var heads are concatenated column-wise, matmul operands cast to bf16.
    The per-call wrapper then does no weight work at all.
    """
    H = params["w1"].shape[1]
    L = params["wm"].shape[1]
    Hp = _round_up(H, 128)
    Lp = _round_up(L, 128)

    w1 = jnp.pad(params["w1"], ((0, 0), (0, Hp - H))).astype(jnp.bfloat16)
    b1 = jnp.pad(params["b1"], ((0, 0), (0, Hp - H))).astype(jnp.float32)
    wm = jnp.pad(params["wm"], ((0, Hp - H), (0, Lp - L)))
    wv = jnp.pad(params["wv"], ((0, Hp - H), (0, Lp - L)))
    wmv = jnp.concatenate([wm, wv], axis=1).astype(jnp.bfloat16)
    bm = jnp.pad(params["bm"], ((0, 0), (0, Lp - L)))
    bv = jnp.pad(params["bv"], ((0, 0), (0, Lp - L)))
    bmv = jnp.concatenate([bm, bv], axis=1).astype(jnp.float32)
    return {"w1": w1, "b1": b1, "wmv": wmv, "bmv": bmv}


def encoder_forward(x, packed, eps, *, latent_dim):
    """Fused Encoder forward.

    x:       [B, input_dim] float32 (un-padded, un-cast)
    packed:  output of pack_params()
    eps:     [B, latent_dim] float32 uniform [0,1) noise (torch.rand_like)
    returns (z, mean, log_var), each [B, latent_dim] float32
    """
    B, Din = x.shape
    Hp = packed["w1"].shape[1]
    Lp = packed["wmv"].shape[1] // 2
    L = latent_dim

    # Batch tile: up to 512 rows per step; for B >= 16 force >= 2 grid steps
    # so the "parallel" axis can shard across both TensorCores on v7x.
    if B >= 16:
        TB = min(512, _round_up(-(-B // 2), 8))
    else:
        TB = _round_up(B, 8)
    Bp = _round_up(B, TB)

    # Row-pad only when B is not a tile multiple (no lane pad / cast on x).
    # eps gets a cheap lane pad to Lp so the z store stays lane-dense.
    if Bp != B:
        x = jnp.pad(x, ((0, Bp - B), (0, 0)))
        eps = jnp.pad(eps, ((0, Bp - B), (0, 0)))
    if Lp != L:
        eps = jnp.pad(eps, ((0, 0), (0, Lp - L)))

    grid = (Bp // TB,)

    # Weights / biases: index_map ignores the batch index -> DMA'd once,
    # VMEM-resident across the whole grid.  (Single-buffering them via
    # pipeline_mode would shave a little more VMEM on v7x; footprint here is
    # already tiny so the default is kept.)
    def w_spec(shape):
        return pl.BlockSpec(shape, lambda i: (0, 0))

    def row_spec(cols):
        return pl.BlockSpec((TB, cols), lambda i: (i, 0))

    z_p, mv_p = pl.pallas_call(
        functools.partial(encoder_kernel, lp=Lp),
        out_shape=(jax.ShapeDtypeStruct((Bp, Lp), jnp.float32),
                   jax.ShapeDtypeStruct((Bp, 2 * Lp), jnp.float32)),
        grid=grid,
        in_specs=[
            row_spec(Din),           # x tile        [TB, Din] (f32, cast in kernel)
            w_spec((Din, Hp)),       # w1            (resident)
            w_spec((1, Hp)),         # b1            (resident)
            w_spec((Hp, 2 * Lp)),    # [wm | wv]     (resident)
            w_spec((1, 2 * Lp)),     # [bm | bv]     (resident)
            row_spec(Lp),            # eps tile      [TB, Lp]
        ],
        out_specs=(row_spec(Lp), row_spec(2 * Lp)),
        compiler_params=pltpu.CompilerParams(
            dimension_semantics=("parallel",)),
    )(x, packed["w1"], packed["b1"], packed["wmv"], packed["bmv"], eps)

    z = z_p[:B, :L]
    mean = mv_p[:B, :L]
    log_var = mv_p[:B, Lp:Lp + L]
    return z, mean, log_var


def init_params(key, input_dim, hidden_dim, latent_dim):
    """Deterministic synthetic parameter init (shapes match nn.Linear layers)."""
    k1, k2, k3, k4, k5, k6 = jax.random.split(key, 6)

    def linear(kw, kb, fan_in, fan_out):
        bound = 1.0 / jnp.sqrt(fan_in)
        w = jax.random.uniform(kw, (fan_in, fan_out), jnp.float32, -bound, bound)
        b = jax.random.uniform(kb, (1, fan_out), jnp.float32, -bound, bound)
        return w, b

    w1, b1 = linear(k1, k2, input_dim, hidden_dim)
    wm, bm = linear(k3, k4, hidden_dim, latent_dim)
    wv, bv = linear(k5, k6, hidden_dim, latent_dim)
    return {"w1": w1, "b1": b1, "wm": wm, "bm": bm, "wv": wv, "bv": bv}


def reference_forward(x, params, eps, matmul_dtype=jnp.float32):
    def mm(a, w):
        return jnp.dot(a.astype(matmul_dtype), w.astype(matmul_dtype),
                       preferred_element_type=jnp.float32)

    h = jnp.maximum(mm(x, params["w1"]) + params["b1"], 0.0)
    mean = mm(h, params["wm"]) + params["bm"]
    log_var = mm(h, params["wv"]) + params["bv"]
    var = jnp.exp(0.5 * log_var)
    z = mean + var * eps
    return z, mean, log_var


if __name__ == "__main__":
    # Small shapes consistent with the module: Linear layers over the last dim.
    B, INPUT_DIM, HIDDEN_DIM, LATENT_DIM = 8, 32, 64, 16

    key = jax.random.PRNGKey(0)
    kx, kp, ke = jax.random.split(key, 3)

    x = jax.random.normal(kx, (B, INPUT_DIM), dtype=jnp.float32)
    params = init_params(kp, INPUT_DIM, HIDDEN_DIM, LATENT_DIM)
    # torch.rand_like -> uniform [0, 1); generated deterministically here and
    # passed into the kernel so Pallas and reference see identical noise.
    # TODO(synk): could be generated in-kernel via pltpu.prng_* when bit-exact
    # parity with externally supplied noise is not required.
    eps = jax.random.uniform(ke, (B, LATENT_DIM), dtype=jnp.float32)

    packed = pack_params(params)            # one-time weight packing
    fwd = jax.jit(encoder_forward, static_argnames=("latent_dim",))

    z, mean, log_var = fwd(x, packed, eps, latent_dim=LATENT_DIM)
    jax.block_until_ready((z, mean, log_var))

    # Tight check against a reference using the same bf16 matmul operands.
    z_b, m_b, lv_b = reference_forward(x, params, eps, matmul_dtype=jnp.bfloat16)
    assert jnp.allclose(z, z_b, atol=1e-3, rtol=1e-3)
    assert jnp.allclose(mean, m_b, atol=1e-3, rtol=1e-3)
    assert jnp.allclose(log_var, lv_b, atol=1e-3, rtol=1e-3)

    # Loose check against the full-f32 PyTorch-equivalent math (bf16 drift).
    z_f, m_f, lv_f = reference_forward(x, params, eps)
    assert jnp.allclose(z, z_f, atol=3e-2, rtol=3e-2)
    assert jnp.allclose(mean, m_f, atol=3e-2, rtol=3e-2)
    assert jnp.allclose(log_var, lv_f, atol=3e-2, rtol=3e-2)

    print("KERNEL_OK")
</pallas_src>

<mosaic_0001>
module attributes {stable_mosaic.version = 11 : i64} {
  func.func @encoder_kernel(%arg0: i32, %arg1: memref<8x32xf32, #tpu.memory_space<vmem>>, %arg2: memref<32x128xbf16, #tpu.memory_space<vmem>>, %arg3: memref<1x128xf32, #tpu.memory_space<vmem>>, %arg4: memref<128x256xbf16, #tpu.memory_space<vmem>>, %arg5: memref<1x256xf32, #tpu.memory_space<vmem>>, %arg6: memref<8x128xf32, #tpu.memory_space<vmem>>, %arg7: memref<8x128xf32, #tpu.memory_space<vmem>>, %arg8: memref<8x256xf32, #tpu.memory_space<vmem>>) attributes {dimension_semantics = [#tpu.dimension_semantics<parallel>], iteration_bounds = array<i64: 1>, scalar_prefetch = 0 : i64, scratch_operands = 0 : i64, tpu.core_type = #tpu.core_type<tc>, window_params = [{transform_indices = @transform_0, window_bounds = array<i64: 8, 32>}, {pipeline_mode = #tpu.pipeline_mode<synchronous>, transform_indices = @transform_1, window_bounds = array<i64: 32, 128>}, {pipeline_mode = #tpu.pipeline_mode<synchronous>, transform_indices = @transform_2, window_bounds = array<i64: 1, 128>}, {pipeline_mode = #tpu.pipeline_mode<synchronous>, transform_indices = @transform_3, window_bounds = array<i64: 128, 256>}, {pipeline_mode = #tpu.pipeline_mode<synchronous>, transform_indices = @transform_4, window_bounds = array<i64: 1, 256>}, {transform_indices = @transform_5, window_bounds = array<i64: 8, 128>}, {transform_indices = @transform_6, window_bounds = array<i64: 8, 128>}, {transform_indices = @transform_7, window_bounds = array<i64: 8, 256>}]} {
    %c0 = arith.constant 0 : index
    %c0_0 = arith.constant 0 : index
    %0 = vector.load %arg1[%c0, %c0_0] : memref<8x32xf32, #tpu.memory_space<vmem>>, vector<8x32xf32>
    %1 = arith.truncf %0 : vector<8x32xf32> to vector<8x32xbf16>
    %c0_1 = arith.constant 0 : index
    %c0_2 = arith.constant 0 : index
    %2 = vector.load %arg2[%c0_1, %c0_2] : memref<32x128xbf16, #tpu.memory_space<vmem>>, vector<32x128xbf16>
    %cst = arith.constant dense<0.000000e+00> : vector<8x128xf32>
    %3 = tpu.matmul %1, %2, %cst {dimension_numbers = #tpu.dot_dimension_numbers<[1], [0], [0], [1], [0, 0, 1, 1], [], []>} : vector<8x32xbf16>, vector<32x128xbf16>, vector<8x128xf32> -> vector<8x128xf32>
    %c0_3 = arith.constant 0 : index
    %c0_4 = arith.constant 0 : index
    %4 = vector.load %arg3[%c0_3, %c0_4] : memref<1x128xf32, #tpu.memory_space<vmem>>, vector<1x128xf32>
    %5 = vector.broadcast %4 : vector<1x128xf32> to vector<8x128xf32>
    %6 = arith.addf %3, %5 : vector<8x128xf32>
    %cst_5 = arith.constant 0.000000e+00 : f32
    %7 = vector.broadcast %cst_5 : f32 to vector<8x128xf32>
    %8 = arith.maximumf %6, %7 : vector<8x128xf32>
    %9 = arith.truncf %8 : vector<8x128xf32> to vector<8x128xbf16>
    %c0_6 = arith.constant 0 : index
    %c0_7 = arith.constant 0 : index
    %10 = vector.load %arg4[%c0_6, %c0_7] : memref<128x256xbf16, #tpu.memory_space<vmem>>, vector<128x256xbf16>
    %cst_8 = arith.constant dense<0.000000e+00> : vector<8x256xf32>
    %11 = tpu.matmul %9, %10, %cst_8 {dimension_numbers = #tpu.dot_dimension_numbers<[1], [0], [0], [1], [0, 0, 1, 1], [], []>} : vector<8x128xbf16>, vector<128x256xbf16>, vector<8x256xf32> -> vector<8x256xf32>
    %c0_9 = arith.constant 0 : index
    %c0_10 = arith.constant 0 : index
    %12 = vector.load %arg5[%c0_9, %c0_10] : memref<1x256xf32, #tpu.memory_space<vmem>>, vector<1x256xf32>
    %13 = vector.broadcast %12 : vector<1x256xf32> to vector<8x256xf32>
    %14 = arith.addf %11, %13 : vector<8x256xf32>
    %c0_11 = arith.constant 0 : index
    %c0_12 = arith.constant 0 : index
    %15 = vector.load %arg8[%c0_11, %c0_12] : memref<8x256xf32, #tpu.memory_space<vmem>>, vector<8x256xf32>
    tpu.vector_store %arg8[%c0_11, %c0_12], %14 {strides = array<i32>} : memref<8x256xf32, #tpu.memory_space<vmem>>, vector<8x256xf32>,
    %16 = vector.extract_strided_slice %14 {offsets = [0, 0], sizes = [8, 128], strides = [1, 1]} : vector<8x256xf32> to vector<8x128xf32>
    %17 = vector.extract_strided_slice %14 {offsets = [0, 128], sizes = [8, 128], strides = [1, 1]} : vector<8x256xf32> to vector<8x128xf32>
    %cst_13 = arith.constant 5.000000e-01 : f32
    %18 = vector.broadcast %cst_13 : f32 to vector<8x128xf32>
    %19 = arith.mulf %18, %17 : vector<8x128xf32>
    %20 = math.exp %19 : vector<8x128xf32>
    %c0_14 = arith.constant 0 : index
    %c0_15 = arith.constant 0 : index
    %21 = vector.load %arg6[%c0_14, %c0_15] : memref<8x128xf32, #tpu.memory_space<vmem>>, vector<8x128xf32>
    %22 = arith.mulf %20, %21 : vector<8x128xf32>
    %23 = arith.addf %16, %22 : vector<8x128xf32>
    %c0_16 = arith.constant 0 : index
    %c0_17 = arith.constant 0 : index
    %24 = vector.load %arg7[%c0_16, %c0_17] : memref<8x128xf32, #tpu.memory_space<vmem>>, vector<8x128xf32>
    tpu.vector_store %arg7[%c0_16, %c0_17], %23 {strides = array<i32>} : memref<8x128xf32, #tpu.memory_space<vmem>>, vector<8x128xf32>,
    return
  }
  func.func @transform_0(%arg0: i32) -> (i32, i32) {
    %c0_i32 = arith.constant 0 : i32
    %c0_i32_0 = arith.constant 0 : i32
    return %arg0, %c0_i32 : i32, i32
  }
  func.func @transform_1(%arg0: i32) -> (i32, i32) {
    %c0_i32 = arith.constant 0 : i32
    %c0_i32_0 = arith.constant 0 : i32
    %c0_i32_1 = arith.constant 0 : i32
    return %c0_i32, %c0_i32_0 : i32, i32
  }
  func.func @transform_2(%arg0: i32) -> (i32, i32) {
    %c0_i32 = arith.constant 0 : i32
    %c0_i32_0 = arith.constant 0 : i32
    %c0_i32_1 = arith.constant 0 : i32
    return %c0_i32, %c0_i32_0 : i32, i32
  }
  func.func @transform_3(%arg0: i32) -> (i32, i32) {
    %c0_i32 = arith.constant 0 : i32
    %c0_i32_0 = arith.constant 0 : i32
    %c0_i32_1 = arith.constant 0 : i32
    return %c0_i32, %c0_i32_0 : i32, i32
  }
  func.func @transform_4(%arg0: i32) -> (i32, i32) {
    %c0_i32 = arith.constant 0 : i32
    %c0_i32_0 = arith.constant 0 : i32
    %c0_i32_1 = arith.constant 0 : i32
    return %c0_i32, %c0_i32_0 : i32, i32
  }
  func.func @transform_5(%arg0: i32) -> (i32, i32) {
    %c0_i32 = arith.constant 0 : i32
    %c0_i32_0 = arith.constant 0 : i32
    return %arg0, %c0_i32 : i32, i32
  }
  func.func @transform_6(%arg0: i32) -> (i32, i32) {
    %c0_i32 = arith.constant 0 : i32
    %c0_i32_0 = arith.constant 0 : i32
    return %arg0, %c0_i32 : i32, i32
  }
  func.func @transform_7(%arg0: i32) -> (i32, i32) {
    %c0_i32 = arith.constant 0 : i32
    %c0_i32_0 = arith.constant 0 : i32
    return %arg0, %c0_i32 : i32, i32
  }
}

</mosaic_0001>

<llo_original>
// kernel: encoder_forward.1
$region0: #{encoder_forward.1}
  #allocation0 [shape = 'u32[]', space=smem, size = 0x4, offset = 0x4, fixed_abs, tag = 'smem constant byte address 0x4 - core index']
  #allocation1 [shape = 'u32[72,128]{1,0:T(1,128)}', space=vmem, size = 0x9000, scoped, tag = 'internal scratch']
  %s0 = inlined_call_operand.hbm [shape: f32[8,32], index: 0, kind: input, shape index: {}]
  %s1 = inlined_call_operand.vmem [shape: bf16[32,128], index: 1, kind: input, shape index: {}]
  %s2 = inlined_call_operand.vmem [shape: f32[1,128], index: 2, kind: input, shape index: {}]
  %s3 = inlined_call_operand.hbm [shape: bf16[128,256], index: 3, kind: input, shape index: {}]
  %s4 = inlined_call_operand.vmem [shape: f32[1,256], index: 4, kind: input, shape index: {}]
  %s5 = inlined_call_operand.vmem [shape: f32[8,128], index: 5, kind: input, shape index: {}]
  %s6 = inlined_call_operand.hbm [shape: f32[8,128], index: 6, kind: output, shape index: {0}]
  %s7 = inlined_call_operand.vmem [shape: f32[8,256], index: 7, kind: output, shape index: {1}]
  %8 = xla_tuple %s6, %s7
  %s9 = sld [smem:[#allocation0]]
  $region50: #{encoder_forward.1} parent=0
    _
  %s11 = ssub.s32 1, %s9
  %s12 = scalar_select 0, %s11, %s9
  $region1: #{encoder_forward.1} parent=0
    #allocation2 [shape = 'u8[4096]{0}', space=vmem, size = 0x1000, scoped, tag = 'input window, operand 0, single buffered']
    #allocation3 [shape = 's32[1]{0}', space=sflag, size = 0x4, scoped, tag = 'scoped memory for encoder_forward.1']
    #allocation4 [shape = 's32[1]{0}', space=sflag, size = 0x4, scoped, tag = 'scoped memory for encoder_forward.1']
    #allocation5 [shape = 'u8[65536]{0}', space=vmem, size = 0x10000, scoped, tag = 'input window, operand 3, single buffered']
    #allocation6 [shape = 's32[1]{0}', space=sflag, size = 0x4, scoped, tag = 'scoped memory for encoder_forward.1']
    #allocation7 [shape = 'u8[4096]{0}', space=vmem, size = 0x1000, scoped, tag = 'output window, operand 0, single buffered']
    %13 = vsyncpa [#allocation3], 0
    %14 = vsyncpa [#allocation6], 0
    %15 = vsyncpa [#allocation4], 0
    // Predicated region
    $region2: #{encoder_forward.1} parent=1 // pred_check
      _
    $region3: #{encoder_forward.1} parent=1 // pred_check_branch
      %17 = sbr.rel (0) target = $region5
    $region4: #{encoder_forward.1} parent=1 // pred_region
      %19 = vsyncadd [#allocation3], 0
      %s21 = sshll.u32 %s0, 4
      %s22 = int_to_ptr.hbm [resolvable:$true] %s21
      %s23 = sshll.u32 [#allocation2], 4
      %s24 = int_to_ptr.vmem [resolvable:$true] %s23
      %26 = dma.hbm_to_vmem [thread:$0]  %s22, 128, %s24, [#allocation3]
    $region5: #{encoder_forward.1} parent=1 // pred_fallthru
      _
    // Predicated region
    $region6: #{encoder_forward.1} parent=1 // pred_check
      _
    $region7: #{encoder_forward.1} parent=1 // pred_check_branch
      %28 = sbr.rel (0) target = $region9
    $region8: #{encoder_forward.1} parent=1 // pred_region
      _
    $region9: #{encoder_forward.1} parent=1 // pred_fallthru
      _
    // Predicated region
    $region10: #{encoder_forward.1} parent=1 // pred_check
      _
    $region11: #{encoder_forward.1} parent=1 // pred_check_branch
      %30 = sbr.rel (0) target = $region13
    $region12: #{encoder_forward.1} parent=1 // pred_region
      _
    $region13: #{encoder_forward.1} parent=1 // pred_fallthru
      _
    // Predicated region
    $region14: #{encoder_forward.1} parent=1 // pred_check
      _
    $region15: #{encoder_forward.1} parent=1 // pred_check_branch
      %32 = sbr.rel (0) target = $region17
    $region16: #{encoder_forward.1} parent=1 // pred_region
      %34 = vsyncadd [#allocation6], 0
      %s35 = sshll.u32 %s3, 4
      %s36 = int_to_ptr.hbm [resolvable:$true] %s35
      %s37 = sshll.u32 [#allocation5], 4
      %s38 = int_to_ptr.vmem [resolvable:$true] %s37
      %43 = dma.hbm_to_vmem [thread:$0]  %s36, 2048, %s38, [#allocation6], 128, 128, 8
    $region17: #{encoder_forward.1} parent=1 // pred_fallthru
      _
    // Predicated region
    $region18: #{encoder_forward.1} parent=1 // pred_check
      _
    $region19: #{encoder_forward.1} parent=1 // pred_check_branch
      %45 = sbr.rel (0) target = $region21
    $region20: #{encoder_forward.1} parent=1 // pred_region
      _
    $region21: #{encoder_forward.1} parent=1 // pred_fallthru
      _
    // Predicated region
    $region22: #{encoder_forward.1} parent=1 // pred_check
      _
    $region23: #{encoder_forward.1} parent=1 // pred_check_branch
      %47 = sbr.rel (0) target = $region25
    $region24: #{encoder_forward.1} parent=1 // pred_region
      _
    $region25: #{encoder_forward.1} parent=1 // pred_fallthru
      _
    // Predicated region
    $region26: #{encoder_forward.1} parent=1 // pred_check
      _
    $region27: #{encoder_forward.1} parent=1 // pred_check_branch
      %49 = sbr.rel (0) target = $region29
    $region28: #{encoder_forward.1} parent=1 // pred_region
      %51 = dma.done [#allocation3], 128
    $region29: #{encoder_forward.1} parent=1 // pred_fallthru
      _
    // Predicated region
    $region30: #{encoder_forward.1} parent=1 // pred_check
      _
    $region31: #{encoder_forward.1} parent=1 // pred_check_branch
      %53 = sbr.rel (0) target = $region33
    $region32: #{encoder_forward.1} parent=1 // pred_region
      %55 = dma.done [#allocation6], 2048
    $region33: #{encoder_forward.1} parent=1 // pred_fallthru
      _
    %v57 = vld [vmem:[#allocation2] sm:$0xff]
    %v58 = vpack.c.bf16 %v57, %v57
    %v59 = vld [vmem:[%s1] sm:$0xf]
    %v60 = vld [vmem:[%s1 + $0x4] sm:$0xf]
    %v61 = vld [vmem:[%s1 + $0x8] sm:$0xf]
    %v62 = vld [vmem:[%s1 + $0xc] sm:$0xf]
    %v63 = vld [vmem:[%s2] sm:$0x1]
    %v65 = vperm.slane %v63, 0
    %v71 = vunpack.c.l.b16 %v59
    %v72 = vunpack.c.l.b16 %v60
    %v73 = vunpack.c.l.b16 %v61
    %v74 = vunpack.c.l.b16 %v62
    %v75 = vpack.c.b16 %v72, %v71
    %v76 = vpack.c.b16 %v74, %v73
    %vm79 = vcmask 261120
    %v81 = vsel %vm79, %v58, 0
    %83 = vmatpush.bf16.msra.mxu0 0
    %84 = vmatpush.bf16.msra.mxu0 0
    %85 = vmatpush.bf16.msra.mxu0 0
    %86 = vmatpush.bf16.msra.mxu0 0
    %87 = vmatpush.bf16.msra.mxu0 0
    %88 = vmatpush.bf16.msra.mxu0 0
    %89 = vmatpush.bf16.msra.mxu0 %v76
    %90 = vmatpush.bf16.msra.mxu0 %v75
    %91 = vmatmul.bf16.gmra.mxu0 %v81
    %v92 = vpop.f32.mrf.mxu0
    %v93 = vadd.f32 %v65, %v92
    %v94 = vpop.f32.mrf.mxu0
    %95 = vdwg.mxu0
    %v96 = vmax.f32 %v93, 0.0
    %v97 = vpack.c.bf16 %v96, %v96
    %v98 = vld [vmem:[#allocation5] sm:$0xff]
    %v99 = vld [vmem:[#allocation5 + $0x8] sm:$0xff]
    %v100 = vld [vmem:[#allocation5 + $0x10] sm:$0xff]
    %v101 = vld [vmem:[#allocation5 + $0x18] sm:$0xff]
    %v102 = vld [vmem:[#allocation5 + $0x20] sm:$0xff]
    %v103 = vld [vmem:[#allocation5 + $0x28] sm:$0xff]
    %v104 = vld [vmem:[#allocation5 + $0x30] sm:$0xff]
    %v105 = vld [vmem:[#allocation5 + $0x38] sm:$0xff]
    %v106 = vld [vmem:[#allocation5 + $0x40] sm:$0xff]
    %v107 = vld [vmem:[#allocation5 + $0x48] sm:$0xff]
    %v108 = vld [vmem:[#allocation5 + $0x50] sm:$0xff]
    %v109 = vld [vmem:[#allocation5 + $0x58] sm:$0xff]
    %v110 = vld [vmem:[#allocation5 + $0x60] sm:$0xff]
    %v111 = vld [vmem:[#allocation5 + $0x68] sm:$0xff]
    %v112 = vld [vmem:[#allocation5 + $0x70] sm:$0xff]
    %v113 = vld [vmem:[#allocation5 + $0x78] sm:$0xff]
    %v114 = vld [vmem:[%s4] sm:$0x3]
    %v116 = vperm.slane %v114, 0
    %v117 = vperm.slane %v114, 1
    %v136 = vunpack.c.l.b16 %v98
    %v137 = vunpack.c.h.b16 %v98
    %v138 = vunpack.c.l.b16 %v99
    %v139 = vunpack.c.h.b16 %v99
    %v140 = vunpack.c.l.b16 %v100
    %v141 = vunpack.c.h.b16 %v100
    %v142 = vunpack.c.l.b16 %v101
    %v143 = vunpack.c.h.b16 %v101
    %v144 = vunpack.c.l.b16 %v102
    %v145 = vunpack.c.h.b16 %v102
    %v146 = vunpack.c.l.b16 %v103
    %v147 = vunpack.c.h.b16 %v103
    %v148 = vunpack.c.l.b16 %v104
    %v149 = vunpack.c.h.b16 %v104
    %v150 = vunpack.c.l.b16 %v105
    %v151 = vunpack.c.h.b16 %v105
    %v152 = vunpack.c.l.b16 %v106
    %v153 = vunpack.c.h.b16 %v106
    %v154 = vunpack.c.l.b16 %v107
    %v155 = vunpack.c.h.b16 %v107
    %v156 = vunpack.c.l.b16 %v108
    %v157 = vunpack.c.h.b16 %v108
    %v158 = vunpack.c.l.b16 %v109
    %v159 = vunpack.c.h.b16 %v109
    %v160 = vunpack.c.l.b16 %v110
    %v161 = vunpack.c.h.b16 %v110
    %v162 = vunpack.c.l.b16 %v111
    %v163 = vunpack.c.h.b16 %v111
    %v164 = vunpack.c.l.b16 %v112
    %v165 = vunpack.c.h.b16 %v112
    %v166 = vunpack.c.l.b16 %v113
    %v167 = vunpack.c.h.b16 %v113
    %v168 = vpack.c.b16 %v138, %v136
    %v169 = vpack.c.b16 %v139, %v137
    %v170 = vpack.c.b16 %v142, %v140
    %v171 = vpack.c.b16 %v143, %v141
    %v172 = vpack.c.b16 %v146, %v144
    %v173 = vpack.c.b16 %v147, %v145
    %v174 = vpack.c.b16 %v150, %v148
    %v175 = vpack.c.b16 %v151, %v149
    %v176 = vpack.c.b16 %v154, %v152
    %v177 = vpack.c.b16 %v155, %v153
    %v178 = vpack.c.b16 %v158, %v156
    %v179 = vpack.c.b16 %v159, %v157
    %v180 = vpack.c.b16 %v162, %v160
    %v181 = vpack.c.b16 %v163, %v161
    %v182 = vpack.c.b16 %v166, %v164
    %v183 = vpack.c.b16 %v167, %v165
    %200 = vmatpush.bf16.msra.mxu0 %v182
    %201 = vmatpush.bf16.msra.mxu0 %v180
    %202 = vmatpush.bf16.msra.mxu0 %v178
    %203 = vmatpush.bf16.msra.mxu0 %v176
    %204 = vmatpush.bf16.msra.mxu0 %v174
    %205 = vmatpush.bf16.msra.mxu0 %v172
    %206 = vmatpush.bf16.msra.mxu0 %v170
    %207 = vmatpush.bf16.msra.mxu0 %v168
    %208 = vmatmul.bf16.gmra.mxu0 %v97
    %v209 = vpop.f32.mrf.mxu0
    %v210 = vadd.f32 %v116, %v209
    %v211 = vpop.f32.mrf.mxu0
    %212 = vdwg.mxu0
    %213 = vmatpush.bf16.msra.mxu0 %v183
    %214 = vmatpush.bf16.msra.mxu0 %v181
    %215 = vmatpush.bf16.msra.mxu0 %v179
    %216 = vmatpush.bf16.msra.mxu0 %v177
    %217 = vmatpush.bf16.msra.mxu0 %v175
    %218 = vmatpush.bf16.msra.mxu0 %v173
    %219 = vmatpush.bf16.msra.mxu0 %v171
    %220 = vmatpush.bf16.msra.mxu0 %v169
    %221 = vmatmul.bf16.gmra.mxu0 %v97
    %v222 = vpop.f32.mrf.mxu0
    %v223 = vadd.f32 %v117, %v222
    %v224 = vpop.f32.mrf.mxu0
    %225 = vdwg.mxu0
    %226 = vst [vmem:[%s7] sm:$0xff] %v210
    %227 = vst [vmem:[%s7 + $0x8] sm:$0xff] %v223
    %v228 = vmul.f32 %v223, 0.5
    %v229 = vmul.f32 %v228, 1.442695
    %v230 = vpow.pop %v229
    %v231 = vld [vmem:[%s5] sm:$0xff]
    %v232 = vmul.f32 %v230, %v231
    %v233 = vadd.f32 %v210, %v232
    %234 = vst [vmem:[#allocation7] sm:$0xff] %v233
    // Predicated region
    $region34: #{encoder_forward.1} parent=1 // pred_check
      _
    $region35: #{encoder_forward.1} parent=1 // pred_check_branch
      %236 = sbr.rel (0) target = $region37
    $region36: #{encoder_forward.1} parent=1 // pred_region
      %238 = vsyncadd [#allocation4], 0
      %s240 = sshll.u32 [#allocation7], 4
      %s241 = int_to_ptr.vmem [resolvable:$true] %s240
      %s242 = sshll.u32 %s6, 4
      %s243 = int_to_ptr.hbm [resolvable:$true] %s242
      %245 = dma.vmem_to_hbm [thread:$0]  %s241, 128, %s243, [#allocation4]
    $region37: #{encoder_forward.1} parent=1 // pred_fallthru
      _
    // Predicated region
    $region38: #{encoder_forward.1} parent=1 // pred_check
      _
    $region39: #{encoder_forward.1} parent=1 // pred_check_branch
      %247 = sbr.rel (0) target = $region41
    $region40: #{encoder_forward.1} parent=1 // pred_region
      _
    $region41: #{encoder_forward.1} parent=1 // pred_fallthru
      _
    // Predicated region
    $region42: #{encoder_forward.1} parent=1 // pred_check
      _
    $region43: #{encoder_forward.1} parent=1 // pred_check_branch
      %249 = sbr.rel (0) target = $region45
    $region44: #{encoder_forward.1} parent=1 // pred_region
      %251 = dma.done [#allocation4], 128
    $region45: #{encoder_forward.1} parent=1 // pred_fallthru
      _
    // Predicated region
    $region46: #{encoder_forward.1} parent=1 // pred_check
      _
    $region47: #{encoder_forward.1} parent=1 // pred_check_branch
      %253 = sbr.rel (0) target = $region49
    $region48: #{encoder_forward.1} parent=1 // pred_region
      _
    $region49: #{encoder_forward.1} parent=1 // pred_fallthru
      _
    %254 = vsyncpa [#allocation3], 1
    %255 = vsyncpa [#allocation6], 1
    %256 = vsyncpa [#allocation4], 1

</llo_original>
